<compile_context>
chip_gen: v7x
topology: tpu7x:2x2x1
jax: 0.10.0
libtpu: 0.0.40
codegen_flags: <defaults>
</compile_context>

<pallas_src>
import functools
import math

import jax
import jax.numpy as jnp
from jax.experimental import pallas as pl
from jax.experimental.pallas import tpu as pltpu

_LOG_EPS = math.log(1e-10)
_VMEM_LIMIT_BYTES = 48 * 1024 * 1024   # safe on v5e/v6e (128 MiB) and v7x (64 MiB)
_VMEM_TILE_BUDGET = 32 * 1024 * 1024   # double-buffered blocks + intermediates


def _round_up(x, m):
    return ((x + m - 1) // m) * m


def dman_kernel(head_ref, ctxx_ref, posmax_ref, pos_ref, out_ref, *, compute_dtype):
    # head_ref  : VMEM (H, 1)      f32   head_x
    # ctxx_ref  : VMEM (1, TQ, 1)  f32   context @ fc_weight.T  (this batch / q-tile)
    # posmax_ref: VMEM (TQ, 1)     f32   row max of pos gamma (over the TRUE key axis)
    # pos_ref   : VMEM (TQ, LK)    f32   position-based gamma tile
    # out_ref   : VMEM (1, H, TQ, LK)    log weights (out dtype)
    head = head_ref[...]                                  # (H, 1)
    ctx_x = ctxx_ref[0]                                   # (TQ, 1)
    pos_max = posmax_ref[...]                             # (TQ, 1)
    pos = pos_ref[...]                                    # (TQ, LK)

    # Per-(head, query-row) offset; key-independent.
    base = ctx_x[None, :, :] + head[:, :, None]           # (H, TQ, 1)

    # Hoisted row max (exact by monotonicity of logsig): small (H, TQ, 1) logsig
    # instead of a full-tile reduce.
    zmax = pos_max[None, :, :] + base                     # (H, TQ, 1)
    ls_max = jnp.minimum(zmax, 0.0) - jnp.log(1.0 + jnp.exp(-jnp.abs(zmax)))

    # Single elementwise pass over the big tile.
    # Stable log-sigmoid: logsig(x) = min(x, 0) - log(1 + exp(-|x|)).
    # (jnp.log1p would shave one VPU add but log(1+exp) is guaranteed to lower.)
    z = (pos[None, :, :] + base).astype(compute_dtype)    # (H, TQ, LK)
    ls = jnp.minimum(z, 0.0) - jnp.log(1.0 + jnp.exp(-jnp.abs(z)))
    out = jnp.maximum(ls - ls_max.astype(compute_dtype), _LOG_EPS)
    out_ref[0] = out.astype(out_ref.dtype)


def _pick_q_tile(key_len_q, key_len_k, num_heads, out_bytes,
                 budget_bytes=_VMEM_TILE_BUDGET):
    """Largest aligned query tile whose per-step VMEM footprint (double-buffered
    out + pos blocks plus in-kernel f32 intermediates) fits the budget."""
    align = 16 if out_bytes < 4 else 8         # bf16 output: keep sublane packing clean
    per_row = key_len_k * (
        2 * num_heads * out_bytes              # output block, double-buffered
        + 2 * 4                                # pos gamma block (f32), double-buffered
        + 2 * num_heads * 4                    # in-kernel intermediates (logits, logsig)
    )
    tq = max(align, (budget_bytes // per_row) // align * align)
    return min(tq, _round_up(key_len_q, align)), align


def dman_forward(context, forward_x, backward_x, head_x, fc_weight, max_len,
                 out_dtype=jnp.float32, compute_dtype=jnp.float32):
    """DMAN forward: context (bsz, key_len, embed_dim) -> (bsz, H, key_len, key_len).

    out_dtype=bf16 halves the dominant HBM writeback (v5e/v6e win) when callers
    accept it; compute_dtype=bf16 additionally halves EUP work (v6e/v7x only).
    Defaults are f32 to match the torch module exactly.
    """
    bsz, key_len, embed_dim = context.shape
    num_heads = head_x.shape[0]
    # torch.take would raise on OOB; JAX gather silently clamps -> guard explicitly.
    assert key_len <= max_len + 1, "key_len must be <= max_len + 1"

    # --- position-based gamma: pos[i, j] = position_x[j + (max_len - i)] ---
    pos_cat = jnp.concatenate(
        [forward_x, jnp.zeros((1,), forward_x.dtype), backward_x]
    ).astype(jnp.float32)                                  # (2*max_len + 1,)
    i = jnp.arange(key_len)
    idx = i[None, :] + (max_len - i[:, None])              # (L, L)
    pos_gamma = pos_cat[idx]                               # (L, L)
    pos_rowmax = jnp.max(pos_gamma, axis=-1, keepdims=True)   # (L, 1) -- TRUE-key row max

    # --- context projection: one XLA batched matmul on the MXU, outside the kernel ---
    ctx_x = context.astype(jnp.float32) @ fc_weight.reshape(embed_dim, 1).astype(jnp.float32)
    # ctx_x: (B, L, 1)

    head2d = head_x.reshape(num_heads, 1).astype(jnp.float32)
    out_bytes = jnp.dtype(out_dtype).itemsize

    # Lane-dense output stores: pad the key axis to a multiple of 128 only when
    # key_len is long enough that masked partial stores would matter.
    lk = key_len
    if key_len >= 128 and key_len % 128 != 0:
        lk = _round_up(key_len, 128)
        pos_gamma = jnp.pad(pos_gamma, ((0, 0), (0, lk - key_len)))

    # Query-row tile under the VMEM budget; pad the query axis so every tile is full
    # (no silent full-key_len fallback that could blow the budget).
    tq, align = _pick_q_tile(key_len, lk, num_heads, out_bytes)
    n_q = pl.cdiv(key_len, tq)
    if n_q == 1 and bsz == 1 and key_len >= 16:
        # v7x megacore balance: make sure at least one parallel grid axis has >= 2 steps.
        tq = _round_up(pl.cdiv(key_len, 2), align)
        n_q = pl.cdiv(key_len, tq)
    lq = n_q * tq
    if lq != key_len:
        pad_q = lq - key_len
        pos_gamma = jnp.pad(pos_gamma, ((0, pad_q), (0, 0)))
        pos_rowmax = jnp.pad(pos_rowmax, ((0, pad_q), (0, 0)))
        ctx_x = jnp.pad(ctx_x, ((0, 0), (0, pad_q), (0, 0)))

    kernel = functools.partial(dman_kernel, compute_dtype=compute_dtype)

    # TODO(synk): the `key_len != context.size(1)` incremental-decoding branch
    # (returning only the last query row) is not implemented; we also assume
    # the context is already batch-first, matching the module's main path.
    out = pl.pallas_call(
        kernel,
        out_shape=jax.ShapeDtypeStruct((bsz, num_heads, lq, lk), out_dtype),
        # Batch innermost: pos_gamma / pos_rowmax block indices are unchanged
        # across consecutive steps, so their DMAs are skipped (VMEM-resident).
        grid=(n_q, bsz),
        in_specs=[
            pl.BlockSpec((num_heads, 1), lambda q, b: (0, 0)),    # head_x (grid-invariant)
            pl.BlockSpec((1, tq, 1), lambda q, b: (b, q, 0)),     # ctx_x projection
            pl.BlockSpec((tq, 1), lambda q, b: (q, 0)),           # pos row max
            pl.BlockSpec((tq, lk), lambda q, b: (q, 0)),          # pos gamma
        ],
        out_specs=pl.BlockSpec((1, num_heads, tq, lk), lambda q, b: (b, 0, q, 0)),
        compiler_params=pltpu.CompilerParams(
            dimension_semantics=("parallel", "parallel"),
            vmem_limit_bytes=_VMEM_LIMIT_BYTES,
        ),
    )(head2d, ctx_x, pos_rowmax, pos_gamma)

    if lq != key_len or lk != key_len:
        out = out[:, :, :key_len, :key_len]
    return out


def dman_reference(context, forward_x, backward_x, head_x, fc_weight, max_len):
    """Pure-JAX re-implementation of the torch forward (correctness check)."""
    key_len = context.shape[1]
    pos_cat = jnp.concatenate(
        [forward_x, jnp.zeros((1,), forward_x.dtype), backward_x])
    i = jnp.arange(key_len)
    idx = i[None, :] + (max_len - i[:, None])
    pos = pos_cat[idx]                                         # (L, L)
    x = pos[None, :, :] + head_x[:, None, None]                # (H, L, L)
    ctx_x = context @ fc_weight.T                              # (B, L, 1)
    logw = jax.nn.sigmoid(ctx_x[:, None, :, :] + x[None])      # (B, H, L, L)
    logw = logw / jnp.max(logw, axis=-1, keepdims=True)
    return jnp.log(jnp.clip(logw, 1e-10, None))


if __name__ == "__main__":
    # Small shapes consistent with the module's forward.
    max_len = 32
    embed_dim = 32
    num_heads = 4
    bsz = 2
    key_len = 16

    key = jax.random.PRNGKey(0)
    k_ctx, k_fwd, k_bwd, k_head, k_fc = jax.random.split(key, 5)

    # Deterministic parameter init mirroring reset_parameters():
    forward_x = jax.random.normal(k_fwd, (max_len,), jnp.float32)      # nn.init.normal_
    backward_x = jax.random.normal(k_bwd, (max_len,), jnp.float32)     # nn.init.normal_
    head_x = jax.random.normal(k_head, (num_heads,), jnp.float32)      # nn.init.normal_
    limit = (6.0 / (embed_dim + 1)) ** 0.5                             # xavier_uniform_
    fc_weight = jax.random.uniform(
        k_fc, (1, embed_dim), jnp.float32, minval=-limit, maxval=limit
    )

    context = jax.random.normal(k_ctx, (bsz, key_len, embed_dim), jnp.float32)

    out = dman_forward(context, forward_x, backward_x, head_x, fc_weight, max_len)
    out = jax.block_until_ready(out)

    ref = dman_reference(context, forward_x, backward_x, head_x, fc_weight, max_len)
    assert out.shape == (bsz, num_heads, key_len, key_len)
    assert jnp.allclose(out, ref, rtol=1e-4, atol=1e-4), "mismatch vs JAX reference"

    print("KERNEL_OK")
</pallas_src>

<mosaic_0001>
module attributes {stable_mosaic.version = 11 : i64} {
  func.func @dman_kernel(%arg0: i32, %arg1: i32, %arg2: memref<4x1xf32, #tpu.memory_space<vmem>>, %arg3: memref<1x16x1xf32, #tpu.memory_space<vmem>>, %arg4: memref<16x1xf32, #tpu.memory_space<vmem>>, %arg5: memref<16x16xf32, #tpu.memory_space<vmem>>, %arg6: memref<1x4x16x16xf32, #tpu.memory_space<vmem>>) attributes {dimension_semantics = [#tpu.dimension_semantics<parallel>, #tpu.dimension_semantics<parallel>], iteration_bounds = array<i64: 1, 2>, scalar_prefetch = 0 : i64, scratch_operands = 0 : i64, tpu.core_type = #tpu.core_type<tc>, window_params = [{pipeline_mode = #tpu.pipeline_mode<synchronous>, transform_indices = @transform_0, window_bounds = array<i64: 4, 1>}, {transform_indices = @transform_1, window_bounds = array<i64: 1, 16, 1>}, {transform_indices = @transform_2, window_bounds = array<i64: 16, 1>}, {transform_indices = @transform_3, window_bounds = array<i64: 16, 16>}, {transform_indices = @transform_4, window_bounds = array<i64: 1, 4, 16, 16>}]} {
    %c0 = arith.constant 0 : index
    %c0_0 = arith.constant 0 : index
    %0 = vector.load %arg2[%c0, %c0_0] : memref<4x1xf32, #tpu.memory_space<vmem>>, vector<4x1xf32>
    %c0_1 = arith.constant 0 : index
    %c0_2 = arith.constant 0 : index
    %c0_3 = arith.constant 0 : index
    %1 = vector.load %arg3[%c0_1, %c0_2, %c0_3] : memref<1x16x1xf32, #tpu.memory_space<vmem>>, vector<1x16x1xf32>
    %2 = vector.shape_cast %1 : vector<1x16x1xf32> to vector<16x1xf32>
    %c0_4 = arith.constant 0 : index
    %c0_5 = arith.constant 0 : index
    %3 = vector.load %arg4[%c0_4, %c0_5] : memref<16x1xf32, #tpu.memory_space<vmem>>, vector<16x1xf32>
    %c0_6 = arith.constant 0 : index
    %c0_7 = arith.constant 0 : index
    %4 = vector.load %arg5[%c0_6, %c0_7] : memref<16x16xf32, #tpu.memory_space<vmem>>, vector<16x16xf32>
    %5 = vector.shape_cast %2 : vector<16x1xf32> to vector<1x16x1xf32>
    %6 = vector.shape_cast %0 : vector<4x1xf32> to vector<4x1x1xf32>
    %7 = vector.broadcast %5 : vector<1x16x1xf32> to vector<4x16x1xf32>
    %8 = vector.broadcast %6 : vector<4x1x1xf32> to vector<4x16x1xf32>
    %9 = arith.addf %7, %8 : vector<4x16x1xf32>
    %10 = vector.shape_cast %3 : vector<16x1xf32> to vector<1x16x1xf32>
    %11 = vector.broadcast %10 : vector<1x16x1xf32> to vector<4x16x1xf32>
    %12 = arith.addf %11, %9 : vector<4x16x1xf32>
    %cst = arith.constant 0.000000e+00 : f32
    %13 = vector.broadcast %cst : f32 to vector<4x16x1xf32>
    %14 = arith.minimumf %12, %13 : vector<4x16x1xf32>
    %15 = math.absf %12 : vector<4x16x1xf32>
    %cst_8 = arith.constant 0.000000e+00 : f32
    %16 = vector.broadcast %cst_8 : f32 to vector<4x16x1xf32>
    %17 = arith.subf %16, %15 : vector<4x16x1xf32>
    %18 = math.exp %17 : vector<4x16x1xf32>
    %cst_9 = arith.constant 1.000000e+00 : f32
    %19 = vector.broadcast %cst_9 : f32 to vector<4x16x1xf32>
    %20 = arith.addf %19, %18 : vector<4x16x1xf32>
    %21 = math.log %20 : vector<4x16x1xf32>
    %22 = arith.subf %14, %21 : vector<4x16x1xf32>
    %23 = vector.shape_cast %4 : vector<16x16xf32> to vector<1x16x16xf32>
    %24 = vector.broadcast %23 : vector<1x16x16xf32> to vector<4x16x16xf32>
    %25 = vector.broadcast %9 : vector<4x16x1xf32> to vector<4x16x16xf32>
    %26 = arith.addf %24, %25 : vector<4x16x16xf32>
    %cst_10 = arith.constant 0.000000e+00 : f32
    %27 = vector.broadcast %cst_10 : f32 to vector<4x16x16xf32>
    %28 = arith.minimumf %26, %27 : vector<4x16x16xf32>
    %29 = math.absf %26 : vector<4x16x16xf32>
    %cst_11 = arith.constant 0.000000e+00 : f32
    %30 = vector.broadcast %cst_11 : f32 to vector<4x16x16xf32>
    %31 = arith.subf %30, %29 : vector<4x16x16xf32>
    %32 = math.exp %31 : vector<4x16x16xf32>
    %cst_12 = arith.constant 1.000000e+00 : f32
    %33 = vector.broadcast %cst_12 : f32 to vector<4x16x16xf32>
    %34 = arith.addf %33, %32 : vector<4x16x16xf32>
    %35 = math.log %34 : vector<4x16x16xf32>
    %36 = arith.subf %28, %35 : vector<4x16x16xf32>
    %37 = vector.broadcast %22 : vector<4x16x1xf32> to vector<4x16x16xf32>
    %38 = arith.subf %36, %37 : vector<4x16x16xf32>
    %cst_13 = arith.constant -23.0258503 : f32
    %39 = vector.broadcast %cst_13 : f32 to vector<4x16x16xf32>
    %40 = arith.maximumf %38, %39 : vector<4x16x16xf32>
    %c0_14 = arith.constant 0 : index
    %c0_15 = arith.constant 0 : index
    %c0_16 = arith.constant 0 : index
    %c0_17 = arith.constant 0 : index
    %41 = vector.load %arg6[%c0_14, %c0_15, %c0_16, %c0_17] : memref<1x4x16x16xf32, #tpu.memory_space<vmem>>, vector<1x4x16x16xf32>
    %42 = vector.shape_cast %41 : vector<1x4x16x16xf32> to vector<4x16x16xf32>
    %43 = vector.shape_cast %40 : vector<4x16x16xf32> to vector<1x4x16x16xf32>
    tpu.vector_store %arg6[%c0_14, %c0_15, %c0_16, %c0_17], %43 {strides = array<i32>} : memref<1x4x16x16xf32, #tpu.memory_space<vmem>>, vector<1x4x16x16xf32>,
    return
  }
  func.func @transform_0(%arg0: i32, %arg1: i32) -> (i32, i32) {
    %c0_i32 = arith.constant 0 : i32
    %c0_i32_0 = arith.constant 0 : i32
    %c0_i32_1 = arith.constant 0 : i32
    return %c0_i32, %c0_i32_0 : i32, i32
  }
  func.func @transform_1(%arg0: i32, %arg1: i32) -> (i32, i32, i32) {
    %c0_i32 = arith.constant 0 : i32
    %c0_i32_0 = arith.constant 0 : i32
    return %arg1, %arg0, %c0_i32 : i32, i32, i32
  }
  func.func @transform_2(%arg0: i32, %arg1: i32) -> (i32, i32) {
    %c0_i32 = arith.constant 0 : i32
    %c0_i32_0 = arith.constant 0 : i32
    return %arg0, %c0_i32 : i32, i32
  }
  func.func @transform_3(%arg0: i32, %arg1: i32) -> (i32, i32) {
    %c0_i32 = arith.constant 0 : i32
    %c0_i32_0 = arith.constant 0 : i32
    return %arg0, %c0_i32 : i32, i32
  }
  func.func @transform_4(%arg0: i32, %arg1: i32) -> (i32, i32, i32, i32) {
    %c0_i32 = arith.constant 0 : i32
    %c0_i32_0 = arith.constant 0 : i32
    %c0_i32_1 = arith.constant 0 : i32
    return %arg1, %c0_i32, %arg0, %c0_i32_0 : i32, i32, i32, i32
  }
}

</mosaic_0001>

<llo_original>
// kernel: tpu_custom_call.1
$region0: #{tpu_custom_call.1}
  #allocation0 [shape = 'u32[]', space=smem, size = 0x4, offset = 0x4, fixed_abs, tag = 'smem constant byte address 0x4 - core index']
  #allocation1 [shape = 'u32[144,128]{1,0:T(1,128)}', space=vmem, size = 0x12000, scoped, tag = 'internal scratch']
  %s0 = inlined_call_operand.vmem [shape: f32[4,1], index: 0, kind: input, shape index: {}]
  %s1 = inlined_call_operand.vmem [shape: f32[2,16,1], index: 1, kind: input, shape index: {}]
  %s2 = inlined_call_operand.vmem [shape: f32[16,1], index: 2, kind: input, shape index: {}]
  %s3 = inlined_call_operand.vmem [shape: f32[16,16], index: 3, kind: input, shape index: {}]
  %s4 = inlined_call_operand.hbm [shape: f32[2,4,16,16], index: 4, kind: output, shape index: {}]
  %s5 = sld [smem:[#allocation0]]
  $region49: #{tpu_custom_call.1} parent=0
    _
  %s7 = ssub.s32 1, %s5
  %s8 = scalar_select 0, %s7, %s5
  $region1: #{tpu_custom_call.1} parent=0
    #allocation2 [shape = 'u8[65536]{0}', space=vmem, size = 0x10000, scoped, tag = 'output window, operand 0']
    #allocation3 [shape = 's32[2]{0}', space=sflag, size = 0x8, scoped, tag = 'scoped memory for tpu_custom_call.1']
    %9 = vsyncpa [#allocation3], 0
    %s10 = scalar_lea.sflag [#allocation3], 1
    %11 = vsyncpa %s10, 0
    loop: start=0, step=1, limit=4
    $region2: #{tpu_custom_call.1} parent=1 // loop_pre_header
      _
    $region3: #{tpu_custom_call.1} parent=1 // loop_header
      %s13 = sphi 0, %s17
      %p14 = scmp.ge.s32.totalorder %s13, 4
      %s20 = sphi 0, %s32
      %s21 = sphi 0, %s28
      %s22 = sphi 0, %s20
      %s23 = sphi 0, %s21
      %s24 = sphi 0, %s22
      %s25 = sphi 0, %s23
      %s33 = sphi 0, %s33
      %s35 = sphi 0, %s33
      %s36 = sphi 0, %s35
      %s50 = sphi 0, %s36
      %s58 = sphi 0, %s60
      %s61 = sphi 0, %s58
      %s62 = sphi 0, %s61
      %s78 = sphi 0, %s62
      %s84 = sphi 0, %s86
      %s87 = sphi 0, %s84
      %s88 = sphi 0, %s87
      %s104 = sphi 0, %s88
      %s110 = sphi 0, %s112
      %s113 = sphi 0, %s110
      %s114 = sphi 0, %s113
      %s130 = sphi 0, %s114
      %s138 = sphi 0, %s140
      %s141 = sphi 0, %s138
      %s142 = sphi 0, %s141
      %s158 = sphi 0, %s142
    $region4: #{tpu_custom_call.1} parent=1 // loop_header_branch
      %16 = sbr.rel (%p14) target = $region8
    $region5: #{tpu_custom_call.1} parent=1 // loop_body
      %s18 = ssub.s32 %s13, 1
      %s19 = ssub.s32 %s13, 2
      %s26 = sadd.s32 1, %s21
      %p27 = scmp.ge.s32.totalorder %s26, 2
      %s28 = scalar_select %p27, 0, %s26
      %s29 = sadd.s32 1, %s20
      %s30 = scalar_select %p27, %s29, %s20
      %p31 = scmp.ge.s32.totalorder %s30, 1
      %s32 = scalar_select %p31, 0, %s30
      %s34 = sadd.s32 %s33, 1
      %p37 = scmp.eq.s32.totalorder %s13, 1
      %p38 = scmp.ne.s32.totalorder %s33, %s35
      %p39 = scmp.eq.s32.totalorder %s13, 0
      %p40 = por %p38, %p39
      %p41 = scmp.ne.s32.totalorder %s33, %s35
      %p42 = scmp.eq.s32.totalorder %s18, 1
      %p43 = por %p41, %p42
      %p44 = scmp.ne.s32.totalorder %s35, %s36
      %p45 = scmp.eq.s32.totalorder %s18, 0
      %p46 = por %p44, %p45
      %p47 = scmp.ne.s32.totalorder %s35, %s36
      %p48 = scmp.eq.s32.totalorder %s19, 1
      %p49 = por %p47, %p48
      %p51 = scmp.ne.s32.totalorder %s36, %s50
      %p52 = scmp.eq.s32.totalorder %s19, 0
      %p53 = por %p51, %p52
      %s54 = ssub.s32 %s21, %s28
      %s55 = ssub.s32 %s20, %s32
      %s56 = sor.u32 %s54, %s55
      %p57 = scmp.eq.s32.totalorder %s56, 0
      %s59 = sadd.s32 %s58, 1
      %s60 = scalar_select %p57, %s58, %s59
      %p63 = pneg %p57
      %p64 = scmp.eq.s32.totalorder %s13, 1
      %p65 = por %p63, %p64
      %p66 = scmp.ne.s32.totalorder %s58, %s61
      %p67 = scmp.eq.s32.totalorder %s13, 0
      %p68 = por %p66, %p67
      %p69 = scmp.ne.s32.totalorder %s58, %s61
      %p70 = scmp.eq.s32.totalorder %s18, 1
      %p71 = por %p69, %p70
      %p72 = scmp.ne.s32.totalorder %s61, %s62
      %p73 = scmp.eq.s32.totalorder %s18, 0
      %p74 = por %p72, %p73
      %p75 = scmp.ne.s32.totalorder %s61, %s62
      %p76 = scmp.eq.s32.totalorder %s19, 1
      %p77 = por %p75, %p76
      %p79 = scmp.ne.s32.totalorder %s62, %s78
      %p80 = scmp.eq.s32.totalorder %s19, 0
      %p81 = por %p79, %p80
      %s82 = ssub.s32 %s20, %s32
      %p83 = scmp.eq.s32.totalorder %s82, 0
      %s85 = sadd.s32 %s84, 1
      %s86 = scalar_select %p83, %s84, %s85
      %p89 = pneg %p83
      %p90 = scmp.eq.s32.totalorder %s13, 1
      %p91 = por %p89, %p90
      %p92 = scmp.ne.s32.totalorder %s84, %s87
      %p93 = scmp.eq.s32.totalorder %s13, 0
      %p94 = por %p92, %p93
      %p95 = scmp.ne.s32.totalorder %s84, %s87
      %p96 = scmp.eq.s32.totalorder %s18, 1
      %p97 = por %p95, %p96
      %p98 = scmp.ne.s32.totalorder %s87, %s88
      %p99 = scmp.eq.s32.totalorder %s18, 0
      %p100 = por %p98, %p99
      %p101 = scmp.ne.s32.totalorder %s87, %s88
      %p102 = scmp.eq.s32.totalorder %s19, 1
      %p103 = por %p101, %p102
      %p105 = scmp.ne.s32.totalorder %s88, %s104
      %p106 = scmp.eq.s32.totalorder %s19, 0
      %p107 = por %p105, %p106
      %s108 = ssub.s32 %s20, %s32
      %p109 = scmp.eq.s32.totalorder %s108, 0
      %s111 = sadd.s32 %s110, 1
      %s112 = scalar_select %p109, %s110, %s111
      %p115 = pneg %p109
      %p116 = scmp.eq.s32.totalorder %s13, 1
      %p117 = por %p115, %p116
      %p118 = scmp.ne.s32.totalorder %s110, %s113
      %p119 = scmp.eq.s32.totalorder %s13, 0
      %p120 = por %p118, %p119
      %p121 = scmp.ne.s32.totalorder %s110, %s113
      %p122 = scmp.eq.s32.totalorder %s18, 1
      %p123 = por %p121, %p122
      %p124 = scmp.ne.s32.totalorder %s113, %s114
      %p125 = scmp.eq.s32.totalorder %s18, 0
      %p126 = por %p124, %p125
      %p127 = scmp.ne.s32.totalorder %s113, %s114
      %p128 = scmp.eq.s32.totalorder %s19, 1
      %p129 = por %p127, %p128
      %p131 = scmp.ne.s32.totalorder %s114, %s130
      %p132 = scmp.eq.s32.totalorder %s19, 0
      %p133 = por %p131, %p132
      %s134 = ssub.s32 %s21, %s28
      %s135 = ssub.s32 %s20, %s32
      %s136 = sor.u32 %s134, %s135
      %p137 = scmp.eq.s32.totalorder %s136, 0
      %s139 = sadd.s32 %s138, 1
      %s140 = scalar_select %p137, %s138, %s139
      %p143 = pneg %p137
      %p144 = scmp.eq.s32.totalorder %s13, 1
      %p145 = por %p143, %p144
      %p146 = scmp.ne.s32.totalorder %s138, %s141
      %p147 = scmp.eq.s32.totalorder %s13, 0
      %p148 = por %p146, %p147
      %p149 = scmp.ne.s32.totalorder %s138, %s141
      %p150 = scmp.eq.s32.totalorder %s18, 1
      %p151 = por %p149, %p150
      %p152 = scmp.ne.s32.totalorder %s141, %s142
      %p153 = scmp.eq.s32.totalorder %s18, 0
      %p154 = por %p152, %p153
      %p155 = scmp.ne.s32.totalorder %s141, %s142
      %p156 = scmp.eq.s32.totalorder %s19, 1
      %p157 = por %p155, %p156
      %p159 = scmp.ne.s32.totalorder %s142, %s158
      %p160 = scmp.eq.s32.totalorder %s19, 0
      %p161 = por %p159, %p160
      %p162 = scmp.le.s32.totalorder 1, %s13
      %p163 = scmp.lt.s32.totalorder %s13, 3
      %p164 = pnand %p162, %p163
      %p165 = pneg %p164
      // Predicated region
      $region9: #{tpu_custom_call.1} parent=5 // pred_check
        _
      $region10: #{tpu_custom_call.1} parent=5 // pred_check_branch
        %167 = sbr.rel (%p164) target = $region12
      $region11: #{tpu_custom_call.1} parent=5 // pred_region
        %s168 = ssub.s32 %s13, 1
        // Predicated region
        $region13: #{tpu_custom_call.1} parent=11 // pred_check
          %p169 = pneg %p46
        $region14: #{tpu_custom_call.1} parent=11 // pred_check_branch
          %171 = sbr.rel (%p169) target = $region16
        $region15: #{tpu_custom_call.1} parent=11 // pred_region
          _
        $region16: #{tpu_custom_call.1} parent=11 // pred_fallthru
          _
        // Predicated region
        $region17: #{tpu_custom_call.1} parent=11 // pred_check
          %p172 = pneg %p100
        $region18: #{tpu_custom_call.1} parent=11 // pred_check_branch
          %174 = sbr.rel (%p172) target = $region20
        $region19: #{tpu_custom_call.1} parent=11 // pred_region
          %s175 = smul.u32 2, %s22
          %p176 = scmp.lt.s32.totalorder %s175, 1
          %s177 = scalar_select %p176, %s175, 1
          %s178 = smul.addr %s177, 8
          %s179 = scalar_lea.vmem %s2, %s178
          %s180 = smul.u32 2, %s22
        $region20: #{tpu_custom_call.1} parent=11 // pred_fallthru
          _
        // Predicated region
        $region21: #{tpu_custom_call.1} parent=11 // pred_check
          %p181 = pneg %p126
        $region22: #{tpu_custom_call.1} parent=11 // pred_check_branch
          %183 = sbr.rel (%p181) target = $region24
        $region23: #{tpu_custom_call.1} parent=11 // pred_region
          %s184 = smul.u32 2, %s22
          %p185 = scmp.lt.s32.totalorder %s184, 1
          %s186 = scalar_select %p185, %s184, 1
          %s187 = smul.addr %s186, 8
          %s188 = scalar_lea.vmem %s3, %s187
          %s189 = smul.u32 2, %s22
        $region24: #{tpu_custom_call.1} parent=11 // pred_fallthru
          _
      $region12: #{tpu_custom_call.1} parent=5 // pred_fallthru
        _
      %p190 = scmp.lt.s32.totalorder %s13, 2
      // Predicated region
      $region25: #{tpu_custom_call.1} parent=5 // pred_check
        %p191 = pneg %p190
      $region26: #{tpu_custom_call.1} parent=5 // pred_check_branch
        %193 = sbr.rel (%p191) target = $region28
      $region27: #{tpu_custom_call.1} parent=5 // pred_region
        // Predicated region
        $region29: #{tpu_custom_call.1} parent=27 // pred_check
          %p194 = pneg %p68
        $region30: #{tpu_custom_call.1} parent=27 // pred_check_branch
          %196 = sbr.rel (%p194) target = $region32
        $region31: #{tpu_custom_call.1} parent=27 // pred_region
          %s197 = smul.u32 2, %s20
          %p198 = scmp.lt.s32.totalorder %s21, 1
          %s199 = scalar_select %p198, %s21, 1
          %p200 = scmp.lt.s32.totalorder %s197, 1
          %s201 = scalar_select %p200, %s197, 1
          %s202 = smul.addr %s199, 2
          %s203 = sadd.s32 %s201, %s202
          %s204 = smul.addr %s203, 8
          %s205 = scalar_lea.vmem %s1, %s204
          %s206 = smul.u32 2, %s20
        $region32: #{tpu_custom_call.1} parent=27 // pred_fallthru
          _
      $region28: #{tpu_custom_call.1} parent=5 // pred_fallthru
        _
      %p207 = scmp.le.s32.totalorder 1, %s13
      %p208 = scmp.lt.s32.totalorder %s13, 3
      %p209 = pnand %p207, %p208
      %p210 = pneg %p209
      // Predicated region
      $region33: #{tpu_custom_call.1} parent=5 // pred_check
        _
      $region34: #{tpu_custom_call.1} parent=5 // pred_check_branch
        %212 = sbr.rel (%p209) target = $region36
      $region35: #{tpu_custom_call.1} parent=5 // pred_region
        %s213 = ssub.s32 %s13, 1
        %p214 = pneg %p46
        %p215 = pneg %p43
        %s216 = smul.u32 2, %s22
        %p217 = scmp.lt.s32.totalorder %s23, 1
        %s218 = scalar_select %p217, %s23, 1
        %p219 = scmp.lt.s32.totalorder %s216, 1
        %s220 = scalar_select %p219, %s216, 1
        %s221 = smul.addr %s218, 2
        %s222 = sadd.s32 %s220, %s221
        %s223 = smul.addr %s222, 8
        %s224 = scalar_lea.vmem %s1, %s223
        %p225 = pneg %p74
        %p226 = pneg %p71
        %s227 = smul.u32 2, %s22
        %p228 = scmp.lt.s32.totalorder %s227, 1
        %s229 = scalar_select %p228, %s227, 1
        %s230 = smul.addr %s229, 8
        %s231 = scalar_lea.vmem %s2, %s230
        %p232 = pneg %p100
        %p233 = pneg %p97
        %s234 = smul.u32 2, %s22
        %p235 = scmp.lt.s32.totalorder %s234, 1
        %s236 = scalar_select %p235, %s234, 1
        %s237 = smul.addr %s236, 8
        %s238 = scalar_lea.vmem %s3, %s237
        %p239 = pneg %p126
        %p240 = pneg %p123
        %p241 = pneg %p154
        %p242 = pneg %p151
        %s243 = sand.u32 %s141, 1
        %s244 = scalar_lea.sflag [#allocation3], %s243
        %s245 = sand.u32 %s141, 1
        %s246 = smul.addr %s245, 64
        %s247 = scalar_lea.vmem [#allocation2], %s246
        %s248 = smul.u32 2, %s22
        %p249 = scmp.lt.s32.totalorder %s23, 1
        %s250 = scalar_select %p249, %s23, 1
        %p251 = scmp.lt.s32.totalorder %s248, 1
        %s252 = scalar_select %p251, %s248, 1
        %s253 = smul.addr %s250, 2
        %s254 = sadd.s32 %s252, %s253
        %s255 = smul.addr %s254, 8
        %s256 = scalar_lea.vmem %s1, %s255
        %s257 = smul.u32 2, %s22
        %s258 = smul.u32 2, %s22
        %p259 = scmp.lt.s32.totalorder %s258, 1
        %s260 = scalar_select %p259, %s258, 1
        %s261 = smul.addr %s260, 8
        %s262 = scalar_lea.vmem %s2, %s261
        %s263 = smul.u32 2, %s22
        %s264 = smul.u32 2, %s22
        %p265 = scmp.lt.s32.totalorder %s264, 1
        %s266 = scalar_select %p265, %s264, 1
        %s267 = smul.addr %s266, 8
        %s268 = scalar_lea.vmem %s3, %s267
        %s269 = smul.u32 2, %s22
        %s270 = smul.u32 2, %s22
        %v271 = vld [vmem:[%s0] sm:$0xf]
        %v272 = vld [vmem:[%s256] sm:$0xff]
        %v273 = vld [vmem:[%s256 + $0x8] sm:$0xff]
        %v274 = vld [vmem:[%s262] sm:$0xff]
        %v275 = vld [vmem:[%s262 + $0x8] sm:$0xff]
        %v276 = vld [vmem:[%s268] sm:$0xff]
        %v277 = vld [vmem:[%s268 + $0x8] sm:$0xff]
        %v280 = vunpack.c.l.s4 1966171168
        %v281 = vunpack.c.0.s8 %v280
        %v282 = vlaneseq
        %v283 = vshrl.u32 %v282, 7
        %v284 = vsub.s32 %v281, %v283
        %v285 = vrot.slane %v271, %v284
        %v286 = vcombine.high %v285, %v285
        %v288 = vunpack.c.l.s4 1966171168
        %v289 = vunpack.c.0.s8 %v288
        %v290 = vlaneseq
        %v291 = vshrl.u32 %v290, 7
        %v292 = vsub.s32 %v289, %v291
        %v293 = vrot.slane %v285, %v292
        %v295 = vunpack.c.l.s4 1966171168
        %v296 = vunpack.c.0.s8 %v295
        %v297 = vlaneseq
        %v298 = vshrl.u32 %v297, 7
        %v299 = vsub.s32 %v296, %v298
        %v300 = vrot.slane %v286, %v299
        %v301 = vcombine.high %v293, %v293
        %v302 = vcombine.high %v300, %v300
        %v303 = vlaneseq
        %v304 = vshrl.u32 %v303, 7
        %v305 = vsub.s32 0, %v304
        %v306 = vrot.slane %v293, %v305
        %v307 = vlaneseq
        %v308 = vshrl.u32 %v307, 7
        %v309 = vsub.s32 0, %v308
        %v310 = vrot.slane %v300, %v309
        %v311 = vlaneseq
        %v312 = vshrl.u32 %v311, 7
        %v313 = vsub.s32 0, %v312
        %v314 = vrot.slane %v301, %v313
        %v315 = vlaneseq
        %v316 = vshrl.u32 %v315, 7
        %v317 = vsub.s32 0, %v316
        %v318 = vrot.slane %v302, %v317
        %v323 = vadd.f32 %v272, %v306
        %v324 = vadd.f32 %v273, %v306
        %v325 = vadd.f32 %v272, %v310
        %v326 = vadd.f32 %v273, %v310
        %v327 = vadd.f32 %v272, %v314
        %v328 = vadd.f32 %v273, %v314
        %v329 = vadd.f32 %v272, %v318
        %v330 = vadd.f32 %v273, %v318
        %v331 = vadd.f32 %v274, %v323
        %v332 = vadd.f32 %v275, %v324
        %v333 = vadd.f32 %v274, %v325
        %v334 = vadd.f32 %v275, %v326
        %v335 = vadd.f32 %v274, %v327
        %v336 = vadd.f32 %v275, %v328
        %v337 = vadd.f32 %v274, %v329
        %v338 = vadd.f32 %v275, %v330
        %v339 = vmin.f32 %v331, 0.0
        %v340 = vmin.f32 %v332, 0.0
        %v341 = vmin.f32 %v333, 0.0
        %v342 = vmin.f32 %v334, 0.0
        %v343 = vmin.f32 %v335, 0.0
        %v344 = vmin.f32 %v336, 0.0
        %v345 = vmin.f32 %v337, 0.0
        %v346 = vmin.f32 %v338, 0.0
        %v347 = vand.u32 2147483647, %v331
        %v348 = vand.u32 2147483647, %v332
        %v349 = vand.u32 2147483647, %v333
        %v350 = vand.u32 2147483647, %v334
        %v351 = vand.u32 2147483647, %v335
        %v352 = vand.u32 2147483647, %v336
        %v353 = vand.u32 2147483647, %v337
        %v354 = vand.u32 2147483647, %v338
        %v355 = vsub.f32 0.0, %v347
        %v356 = vsub.f32 0.0, %v348
        %v357 = vsub.f32 0.0, %v349
        %v358 = vsub.f32 0.0, %v350
        %v359 = vsub.f32 0.0, %v351
        %v360 = vsub.f32 0.0, %v352
        %v361 = vsub.f32 0.0, %v353
        %v362 = vsub.f32 0.0, %v354
        %v363 = vmul.f32 %v355, 1.442695
        %v364 = vpow.pop %v363
        %v365 = vmul.f32 %v356, 1.442695
        %v366 = vpow.pop %v365
        %v367 = vmul.f32 %v357, 1.442695
        %v368 = vpow.pop %v367
        %v369 = vmul.f32 %v358, 1.442695
        %v370 = vpow.pop %v369
        %v371 = vmul.f32 %v359, 1.442695
        %v372 = vpow.pop %v371
        %v373 = vmul.f32 %v360, 1.442695
        %v374 = vpow.pop %v373
        %v375 = vmul.f32 %v361, 1.442695
        %v376 = vpow.pop %v375
        %v377 = vmul.f32 %v362, 1.442695
        %v378 = vpow.pop %v377
        %v379 = vadd.f32 %v364, 1.0
        %v380 = vadd.f32 %v366, 1.0
        %v381 = vadd.f32 %v368, 1.0
        %v382 = vadd.f32 %v370, 1.0
        %v383 = vadd.f32 %v372, 1.0
        %v384 = vadd.f32 %v374, 1.0
        %v385 = vadd.f32 %v376, 1.0
        %v386 = vadd.f32 %v378, 1.0
        %v387 = vlog2.pop %v379
        %v388 = vmul.f32 %v387, 0.6931472
        %v389 = vlog2.pop %v380
        %v390 = vmul.f32 %v389, 0.6931472
        %v391 = vlog2.pop %v381
        %v392 = vmul.f32 %v391, 0.6931472
        %v393 = vlog2.pop %v382
        %v394 = vmul.f32 %v393, 0.6931472
        %v395 = vlog2.pop %v383
        %v396 = vmul.f32 %v395, 0.6931472
        %v397 = vlog2.pop %v384
        %v398 = vmul.f32 %v397, 0.6931472
        %v399 = vlog2.pop %v385
        %v400 = vmul.f32 %v399, 0.6931472
        %v401 = vlog2.pop %v386
        %v402 = vmul.f32 %v401, 0.6931472
        %v403 = vsub.f32 %v339, %v388
        %v404 = vsub.f32 %v340, %v390
        %v405 = vsub.f32 %v341, %v392
        %v406 = vsub.f32 %v342, %v394
        %v407 = vsub.f32 %v343, %v396
        %v408 = vsub.f32 %v344, %v398
        %v409 = vsub.f32 %v345, %v400
        %v410 = vsub.f32 %v346, %v402
        %412 = vset.pattern.permute.xlu0 0
        %413 = vperm.xlu0 %412, %v323
        %v414 = vpop.permute.xlu0 %413
        %417 = vset.pattern.permute.xlu0 0
        %418 = vperm.xlu0 %417, %v324
        %v419 = vpop.permute.xlu0 %418
        %422 = vset.pattern.permute.xlu0 0
        %423 = vperm.xlu0 %422, %v325
        %v424 = vpop.permute.xlu0 %423
        %427 = vset.pattern.permute.xlu0 0
        %428 = vperm.xlu0 %427, %v326
        %v429 = vpop.permute.xlu0 %428
        %432 = vset.pattern.permute.xlu0 0
        %433 = vperm.xlu0 %432, %v327
        %v434 = vpop.permute.xlu0 %433
        %437 = vset.pattern.permute.xlu0 0
        %438 = vperm.xlu0 %437, %v328
        %v439 = vpop.permute.xlu0 %438
        %442 = vset.pattern.permute.xlu0 0
        %443 = vperm.xlu0 %442, %v329
        %v444 = vpop.permute.xlu0 %443
        %447 = vset.pattern.permute.xlu0 0
        %448 = vperm.xlu0 %447, %v330
        %v449 = vpop.permute.xlu0 %448
        %v451 = vadd.f32 %v276, %v414
        %v452 = vadd.f32 %v277, %v419
        %v453 = vadd.f32 %v276, %v424
        %v454 = vadd.f32 %v277, %v429
        %v455 = vadd.f32 %v276, %v434
        %v456 = vadd.f32 %v277, %v439
        %v457 = vadd.f32 %v276, %v444
        %v458 = vadd.f32 %v277, %v449
        %v459 = vmin.f32 %v451, 0.0
        %v460 = vmin.f32 %v452, 0.0
        %v461 = vmin.f32 %v453, 0.0
        %v462 = vmin.f32 %v454, 0.0
        %v463 = vmin.f32 %v455, 0.0
        %v464 = vmin.f32 %v456, 0.0
        %v465 = vmin.f32 %v457, 0.0
        %v466 = vmin.f32 %v458, 0.0
        %v467 = vand.u32 2147483647, %v451
        %v468 = vand.u32 2147483647, %v452
        %v469 = vand.u32 2147483647, %v453
        %v470 = vand.u32 2147483647, %v454
        %v471 = vand.u32 2147483647, %v455
        %v472 = vand.u32 2147483647, %v456
        %v473 = vand.u32 2147483647, %v457
        %v474 = vand.u32 2147483647, %v458
        %v475 = vsub.f32 0.0, %v467
        %v476 = vsub.f32 0.0, %v468
        %v477 = vsub.f32 0.0, %v469
        %v478 = vsub.f32 0.0, %v470
        %v479 = vsub.f32 0.0, %v471
        %v480 = vsub.f32 0.0, %v472
        %v481 = vsub.f32 0.0, %v473
        %v482 = vsub.f32 0.0, %v474
        %v483 = vmul.f32 %v475, 1.442695
        %v484 = vpow.pop %v483
        %v485 = vmul.f32 %v476, 1.442695
        %v486 = vpow.pop %v485
        %v487 = vmul.f32 %v477, 1.442695
        %v488 = vpow.pop %v487
        %v489 = vmul.f32 %v478, 1.442695
        %v490 = vpow.pop %v489
        %v491 = vmul.f32 %v479, 1.442695
        %v492 = vpow.pop %v491
        %v493 = vmul.f32 %v480, 1.442695
        %v494 = vpow.pop %v493
        %v495 = vmul.f32 %v481, 1.442695
        %v496 = vpow.pop %v495
        %v497 = vmul.f32 %v482, 1.442695
        %v498 = vpow.pop %v497
        %v499 = vadd.f32 %v484, 1.0
        %v500 = vadd.f32 %v486, 1.0
        %v501 = vadd.f32 %v488, 1.0
        %v502 = vadd.f32 %v490, 1.0
        %v503 = vadd.f32 %v492, 1.0
        %v504 = vadd.f32 %v494, 1.0
        %v505 = vadd.f32 %v496, 1.0
        %v506 = vadd.f32 %v498, 1.0
        %v507 = vlog2.pop %v499
        %v508 = vmul.f32 %v507, 0.6931472
        %v509 = vlog2.pop %v500
        %v510 = vmul.f32 %v509, 0.6931472
        %v511 = vlog2.pop %v501
        %v512 = vmul.f32 %v511, 0.6931472
        %v513 = vlog2.pop %v502
        %v514 = vmul.f32 %v513, 0.6931472
        %v515 = vlog2.pop %v503
        %v516 = vmul.f32 %v515, 0.6931472
        %v517 = vlog2.pop %v504
        %v518 = vmul.f32 %v517, 0.6931472
        %v519 = vlog2.pop %v505
        %v520 = vmul.f32 %v519, 0.6931472
        %v521 = vlog2.pop %v506
        %v522 = vmul.f32 %v521, 0.6931472
        %v523 = vsub.f32 %v459, %v508
        %v524 = vsub.f32 %v460, %v510
        %v525 = vsub.f32 %v461, %v512
        %v526 = vsub.f32 %v462, %v514
        %v527 = vsub.f32 %v463, %v516
        %v528 = vsub.f32 %v464, %v518
        %v529 = vsub.f32 %v465, %v520
        %v530 = vsub.f32 %v466, %v522
        %532 = vset.pattern.permute.xlu0 0
        %533 = vperm.xlu0 %532, %v403
        %v534 = vpop.permute.xlu0 %533
        %537 = vset.pattern.permute.xlu0 0
        %538 = vperm.xlu0 %537, %v404
        %v539 = vpop.permute.xlu0 %538
        %542 = vset.pattern.permute.xlu0 0
        %543 = vperm.xlu0 %542, %v405
        %v544 = vpop.permute.xlu0 %543
        %547 = vset.pattern.permute.xlu0 0
        %548 = vperm.xlu0 %547, %v406
        %v549 = vpop.permute.xlu0 %548
        %552 = vset.pattern.permute.xlu0 0
        %553 = vperm.xlu0 %552, %v407
        %v554 = vpop.permute.xlu0 %553
        %557 = vset.pattern.permute.xlu0 0
        %558 = vperm.xlu0 %557, %v408
        %v559 = vpop.permute.xlu0 %558
        %562 = vset.pattern.permute.xlu0 0
        %563 = vperm.xlu0 %562, %v409
        %v564 = vpop.permute.xlu0 %563
        %567 = vset.pattern.permute.xlu0 0
        %568 = vperm.xlu0 %567, %v410
        %v569 = vpop.permute.xlu0 %568
        %v571 = vsub.f32 %v523, %v534
        %v572 = vsub.f32 %v524, %v539
        %v573 = vsub.f32 %v525, %v544
        %v574 = vsub.f32 %v526, %v549
        %v575 = vsub.f32 %v527, %v554
        %v576 = vsub.f32 %v528, %v559
        %v577 = vsub.f32 %v529, %v564
        %v578 = vsub.f32 %v530, %v569
        %v579 = vmax.f32 %v571, -23.02585
        %v580 = vmax.f32 %v572, -23.02585
        %v581 = vmax.f32 %v573, -23.02585
        %v582 = vmax.f32 %v574, -23.02585
        %v583 = vmax.f32 %v575, -23.02585
        %v584 = vmax.f32 %v576, -23.02585
        %v585 = vmax.f32 %v577, -23.02585
        %v586 = vmax.f32 %v578, -23.02585
        %vm587 = vcmask 130048
        %588 = vst.msk [vmem:[%s247] sm:$0xff] %vm587, %v579
        %589 = vst.msk [vmem:[%s247 + $0x8] sm:$0xff] %vm587, %v580
        %590 = vst.msk [vmem:[%s247 + $0x10] sm:$0xff] %vm587, %v581
        %591 = vst.msk [vmem:[%s247 + $0x18] sm:$0xff] %vm587, %v582
        %592 = vst.msk [vmem:[%s247 + $0x20] sm:$0xff] %vm587, %v583
        %593 = vst.msk [vmem:[%s247 + $0x28] sm:$0xff] %vm587, %v584
        %594 = vst.msk [vmem:[%s247 + $0x30] sm:$0xff] %vm587, %v585
        %595 = vst.msk [vmem:[%s247 + $0x38] sm:$0xff] %vm587, %v586
        %s596 = sand.u32 %s141, 1
        %s597 = scalar_lea.sflag [#allocation3], %s596
        %s598 = sand.u32 %s141, 1
        %s599 = smul.addr %s598, 64
        %s600 = scalar_lea.vmem [#allocation2], %s599
        // Predicated region
        $region37: #{tpu_custom_call.1} parent=35 // pred_check
          %p601 = pneg %p151
        $region38: #{tpu_custom_call.1} parent=35 // pred_check_branch
          %603 = sbr.rel (%p601) target = $region40
        $region39: #{tpu_custom_call.1} parent=35 // pred_region
          %s604 = smul.u32 2, %s22
          %s606 = ssub.s32 1024, 1024
          %607 = vsyncadd %s597, %s606
          %s608 = smul.addr %s23, 8
          %s609 = sadd.s32 %s604, %s608
          %s610 = smul.addr %s609, 128
          %s611 = scalar_lea.hbm %s4, %s610
          %s612 = sshll.u32 %s600, 4
          %s613 = int_to_ptr.vmem [resolvable:$true] %s612
          %618 = dma.vmem_to_hbm [thread:$0]  %s613, 1024, %s611, %s597, 128, 128, 8
        $region40: #{tpu_custom_call.1} parent=35 // pred_fallthru
          _
      $region36: #{tpu_custom_call.1} parent=5 // pred_fallthru
        _
      %p619 = scmp.le.s32.totalorder 2, %s13
      // Predicated region
      $region41: #{tpu_custom_call.1} parent=5 // pred_check
        %p620 = pneg %p619
      $region42: #{tpu_custom_call.1} parent=5 // pred_check_branch
        %622 = sbr.rel (%p620) target = $region44
      $region43: #{tpu_custom_call.1} parent=5 // pred_region
        %s623 = ssub.s32 %s13, 2
        // Predicated region
        $region45: #{tpu_custom_call.1} parent=43 // pred_check
          %p624 = pneg %p157
        $region46: #{tpu_custom_call.1} parent=43 // pred_check_branch
          %626 = sbr.rel (%p624) target = $region48
        $region47: #{tpu_custom_call.1} parent=43 // pred_region
          %s627 = sand.u32 %s142, 1
          %s628 = scalar_lea.sflag [#allocation3], %s627
          %s629 = sand.u32 %s142, 1
          %s630 = smul.addr %s629, 64
          %s631 = scalar_lea.vmem [#allocation2], %s630
          %632 = dma.done %s628, 1024
        $region48: #{tpu_custom_call.1} parent=43 // pred_fallthru
          _
      $region44: #{tpu_custom_call.1} parent=5 // pred_fallthru
        _
    $region6: #{tpu_custom_call.1} parent=1 // loop_footer
      %s17 = sadd.s32 1, %s13
    $region7: #{tpu_custom_call.1} parent=1 // loop_footer_branch
      %12 = sbr.rel target = $region3
    $region8: #{tpu_custom_call.1} parent=1 // loop_exit
      _
    %633 = vsyncpa [#allocation3], 1
    %s634 = scalar_lea.sflag [#allocation3], 1
    %635 = vsyncpa %s634, 1

</llo_original>
